<compile_context>
chip_gen: v6e
topology: v6e:2x2x1
jax: 0.10.0
libtpu: 0.0.40
codegen_flags: <defaults>
</compile_context>

<pallas_src>
import functools

import jax
import jax.numpy as jnp
import numpy as np
from jax.experimental import pallas as pl
from jax.experimental.pallas import tpu as pltpu

_INNER_MLP_MULT = 2
_BN_EPS = 1e-5
_VMEM_LIMIT = 32 * 1024 * 1024


# --------------------------------------------------------------------------------------
# small helpers
# --------------------------------------------------------------------------------------
def _round_up(x, m):
    return ((x + m - 1) // m) * m


def _pad2(x, rows, cols):
    if x.shape == (rows, cols):
        return x
    return jnp.pad(x, ((0, rows - x.shape[0]), (0, cols - x.shape[1])))


# --------------------------------------------------------------------------------------
# kernels
# --------------------------------------------------------------------------------------
def _rowtile_matmul_kernel(mat_ref, feat_ref, out_ref):
    # out[r, :] = mat[r, :] @ feat  (bf16 x bf16, f32 accumulation, bf16 store)
    out_ref[...] = jnp.dot(mat_ref[...], feat_ref[...],
                           preferred_element_type=jnp.float32).astype(out_ref.dtype)


def _mlp_stats_kernel(xa_ref, xb_ref, w1_ref, b1_ref, sum_ref, ssq_ref,
                      *, n_valid, row_tile):
    """Accumulate global (train-mode) BatchNorm sum / sumsq of the first linear layer.

    Padded rows (row index >= n_valid) are masked out of the statistics.
    """
    @pl.when(pl.program_id(0) == 0)
    def _():
        sum_ref[...] = jnp.zeros_like(sum_ref)
        ssq_ref[...] = jnp.zeros_like(ssq_ref)

    # concat-free / fused K = 2*DP first-layer matmul (vreg-level concat of the tiles)
    x = jnp.concatenate([xa_ref[...], xb_ref[...]], axis=-1)           # (T, 2*DP) bf16
    h = jnp.dot(x, w1_ref[...], preferred_element_type=jnp.float32) + b1_ref[...]

    row0 = pl.program_id(0) * row_tile
    rows = row0 + jax.lax.broadcasted_iota(jnp.int32, h.shape, 0)
    mask = (rows < n_valid).astype(jnp.float32)
    hm = h * mask
    sum_ref[...] += jnp.sum(hm, axis=0, keepdims=True)
    ssq_ref[...] += jnp.sum(hm * h, axis=0, keepdims=True)


def _mlp_apply_kernel(xa_ref, xb_ref, w1_ref, b1_ref, scale_ref, shift_ref,
                      w2_ref, b2_ref, *out_refs):
    """Linear -> (precomputed BN scale/shift) -> ReLU -> Linear, lane-dense stores."""
    x = jnp.concatenate([xa_ref[...], xb_ref[...]], axis=-1)           # (T, 2*DP) bf16
    h = jnp.dot(x, w1_ref[...], preferred_element_type=jnp.float32) + b1_ref[...]
    h = h * scale_ref[...] + shift_ref[...]
    h = jnp.maximum(h, 0.0).astype(jnp.bfloat16)
    y = jnp.dot(h, w2_ref[...], preferred_element_type=jnp.float32) + b2_ref[...]
    out_refs[0][...] = y
    if len(out_refs) > 1:                                              # bf16 copy for the scatter
        out_refs[1][...] = y.astype(jnp.bfloat16)


# --------------------------------------------------------------------------------------
# pallas_call wrappers
# --------------------------------------------------------------------------------------
def _incidence_matmul(mat_bf, feat_bf, rows_pad, cols_pad, DP, tile):
    """Row-tiled (rows_pad, cols_pad) @ (cols_pad, DP) -> (rows_pad, DP) bf16."""
    return pl.pallas_call(
        _rowtile_matmul_kernel,
        out_shape=jax.ShapeDtypeStruct((rows_pad, DP), jnp.bfloat16),
        grid_spec=pltpu.PrefetchScalarGridSpec(
            num_scalar_prefetch=0,
            grid=(rows_pad // tile,),
            in_specs=[pl.BlockSpec((tile, cols_pad), lambda i: (i, 0)),   # Inc / Inc^T row tile
                      pl.BlockSpec((cols_pad, DP), lambda i: (0, 0))],    # dense feats, resident
            out_specs=pl.BlockSpec((tile, DP), lambda i: (i, 0))),
        compiler_params=pltpu.CompilerParams(
            dimension_semantics=("parallel",),
            vmem_limit_bytes=_VMEM_LIMIT),
    )(mat_bf, feat_bf)


def _mlp_stats(x_a, x_b, w1, b1, rows_pad, tile, DP, HP, n_valid):
    kern = functools.partial(_mlp_stats_kernel, n_valid=n_valid, row_tile=tile)
    rowwise = lambda i: (i, 0)
    resident = lambda i: (0, 0)
    return pl.pallas_call(
        kern,
        out_shape=(jax.ShapeDtypeStruct((1, HP), jnp.float32),
                   jax.ShapeDtypeStruct((1, HP), jnp.float32)),
        grid_spec=pltpu.PrefetchScalarGridSpec(
            num_scalar_prefetch=0,
            grid=(rows_pad // tile,),
            in_specs=[pl.BlockSpec((tile, DP), rowwise),      # x_a (bf16)
                      pl.BlockSpec((tile, DP), rowwise),      # x_b (bf16)
                      pl.BlockSpec((2 * DP, HP), resident),   # fused w1 (bf16)
                      pl.BlockSpec((1, HP), resident)],       # b1
            out_specs=(pl.BlockSpec((1, HP), resident),       # global BN sum (accumulator)
                       pl.BlockSpec((1, HP), resident))),     # global BN sumsq (accumulator)
        compiler_params=pltpu.CompilerParams(
            dimension_semantics=("arbitrary",),               # carries the accumulators
            vmem_limit_bytes=_VMEM_LIMIT),
    )(x_a, x_b, w1, b1)


def _mlp_apply(x_a, x_b, w1, b1, scale, shift, w2, b2, rows_pad, tile, DP, HP,
               emit_bf16):
    rowwise = lambda i: (i, 0)
    resident = lambda i: (0, 0)
    if emit_bf16:
        out_shape = (jax.ShapeDtypeStruct((rows_pad, DP), jnp.float32),
                     jax.ShapeDtypeStruct((rows_pad, DP), jnp.bfloat16))
        out_specs = (pl.BlockSpec((tile, DP), rowwise),
                     pl.BlockSpec((tile, DP), rowwise))
    else:
        out_shape = jax.ShapeDtypeStruct((rows_pad, DP), jnp.float32)
        out_specs = pl.BlockSpec((tile, DP), rowwise)
    res = pl.pallas_call(
        _mlp_apply_kernel,
        out_shape=out_shape,
        grid_spec=pltpu.PrefetchScalarGridSpec(
            num_scalar_prefetch=0,
            grid=(rows_pad // tile,),
            in_specs=[pl.BlockSpec((tile, DP), rowwise),      # x_a (bf16)
                      pl.BlockSpec((tile, DP), rowwise),      # x_b (bf16)
                      pl.BlockSpec((2 * DP, HP), resident),   # fused w1 (bf16)
                      pl.BlockSpec((1, HP), resident),        # b1
                      pl.BlockSpec((1, HP), resident),        # BN scale
                      pl.BlockSpec((1, HP), resident),        # BN shift
                      pl.BlockSpec((HP, DP), resident),       # w2 (bf16)
                      pl.BlockSpec((1, DP), resident)],       # b2
            out_specs=out_specs),
        compiler_params=pltpu.CompilerParams(
            dimension_semantics=("parallel",),                # independent row tiles
            vmem_limit_bytes=_VMEM_LIMIT),
    )(x_a, x_b, w1, b1, scale, shift, w2, b2)
    if emit_bf16:
        return res[0], res[1]
    return res, None


def _mlp_bn(x_a, x_b, params, n_valid, rows_pad, tile, DP, HP, emit_bf16):
    """Linear -> BatchNorm1d(train, global stats over n_valid rows) -> ReLU -> Linear."""
    s, q = _mlp_stats(x_a, x_b, params["w1"], params["b1"], rows_pad, tile, DP, HP, n_valid)
    inv_n = jnp.float32(1.0 / n_valid)
    mean = s * inv_n
    var = jnp.maximum(q * inv_n - mean * mean, 0.0)           # biased variance (BN training)
    scale = params["gamma"] * jax.lax.rsqrt(var + _BN_EPS)
    shift = params["beta"] - mean * scale
    return _mlp_apply(x_a, x_b, params["w1"], params["b1"], scale, shift,
                      params["w2"], params["b2"], rows_pad, tile, DP, HP, emit_bf16)


# --------------------------------------------------------------------------------------
# parameter construction / padding
# --------------------------------------------------------------------------------------
def init_mlp_params(key, rep_dim):
    """Params for get_mlp(2*rep_dim, rep_dim*_INNER_MLP_MULT, rep_dim, 2)."""
    hidden = rep_dim * _INNER_MLP_MULT
    k1, k2, k3, k4 = jax.random.split(key, 4)
    return dict(
        w1=jax.random.normal(k1, (2 * rep_dim, hidden), jnp.float32) * 0.1,
        b1=jax.random.normal(k2, (1, hidden), jnp.float32) * 0.05,
        gamma=jnp.ones((1, hidden), jnp.float32),
        beta=jnp.zeros((1, hidden), jnp.float32),
        w2=jax.random.normal(k3, (hidden, rep_dim), jnp.float32) * 0.1,
        b2=jax.random.normal(k4, (1, rep_dim), jnp.float32) * 0.05)


def _pad_params(p, D, DP, HP):
    # Zero padding keeps padded hidden / output columns exactly 0 end-to-end:
    # h_pad = 0, scale_pad = shift_pad = 0, relu(0) = 0, 0 @ w2_pad = 0.
    w1a = _pad2(p["w1"][:D], DP, HP)
    w1b = _pad2(p["w1"][D:], DP, HP)
    return dict(
        w1=jnp.concatenate([w1a, w1b], axis=0).astype(jnp.bfloat16),   # fused (2*DP, HP)
        b1=_pad2(p["b1"], 1, HP),
        gamma=_pad2(p["gamma"], 1, HP),
        beta=_pad2(p["beta"], 1, HP),
        w2=_pad2(p["w2"], HP, DP).astype(jnp.bfloat16),
        b2=_pad2(p["b2"], 1, DP))


# --------------------------------------------------------------------------------------
# forward
# --------------------------------------------------------------------------------------
def edge_node_forward(node_rep, edge_rep, incidence, edge_params, node_params,
                      *, mlp_row_tile=1024):
    N, D = node_rep.shape
    E = edge_rep.shape[0]
    H = edge_params["w2"].shape[0]
    DP = _round_up(D, 128)                       # lane-dense feature dim
    HP = _round_up(H, 128)                       # lane-dense hidden dim

    # Row tiles: bounded by mlp_row_tile, sublane multiple of 16 (bf16); rows are padded
    # to a tile multiple so there is never a single oversized fallback block.
    want = _round_up(mlp_row_tile, 16)
    tile_e = min(want, _round_up(E, 16))
    tile_n = min(want, _round_up(N, 16))
    E_pad = _round_up(E, tile_e)
    N_pad = _round_up(N, tile_n)

    # bf16 streamed copies (zero padding; 0/1 incidence entries are exact in bf16).
    node_bf = _pad2(node_rep, N_pad, DP).astype(jnp.bfloat16)
    edge_bf = _pad2(edge_rep, E_pad, DP).astype(jnp.bfloat16)
    inc_bf = _pad2(incidence, E_pad, N_pad).astype(jnp.bfloat16)
    incT_bf = inc_bf.T                            # one-time transpose: scatter needs no per-tile vxpose

    ep = _pad_params(edge_params, D, DP, HP)
    npar = _pad_params(node_params, D, DP, HP)

    # 1) node -> edge gather: node2edge = Inc @ node          (bf16 out)
    node2edge_bf = _incidence_matmul(inc_bf, node_bf, E_pad, N_pad, DP, tile_e)

    # 2) edge MLP: edge_out = MLP(cat([edge_rep, node2edge], -1)); also emit bf16 copy
    edge_out_f32, edge_out_bf = _mlp_bn(edge_bf, node2edge_bf, ep, E, E_pad, tile_e,
                                        DP, HP, emit_bf16=True)

    # 3) edge -> node scatter: edge2node = Inc^T @ edge_out   (bf16 out)
    edge2node_bf = _incidence_matmul(incT_bf, edge_out_bf, N_pad, E_pad, DP, tile_n)

    # 4) node MLP: node_out = MLP(cat([node_rep, edge2node], -1))
    node_out_f32, _ = _mlp_bn(node_bf, edge2node_bf, npar, N, N_pad, tile_n,
                              DP, HP, emit_bf16=False)

    # TODO(synk): if the surrounding model can carry lane-padded tensors, drop these slices.
    return node_out_f32[:N, :D], edge_out_f32[:E, :D]


# --------------------------------------------------------------------------------------
# pure-JAX references
# --------------------------------------------------------------------------------------
def _mlp_ref_mixed(x_a, x_b, p):
    """Same math / precision as the kernels (bf16 matmuls, f32 stats, scale/shift BN)."""
    x = jnp.concatenate([x_a.astype(jnp.bfloat16), x_b.astype(jnp.bfloat16)], axis=-1)
    h = jnp.dot(x, p["w1"].astype(jnp.bfloat16),
                preferred_element_type=jnp.float32) + p["b1"]
    mean = h.mean(axis=0, keepdims=True)
    var = jnp.maximum((h * h).mean(axis=0, keepdims=True) - mean * mean, 0.0)
    scale = p["gamma"] * jax.lax.rsqrt(var + _BN_EPS)
    shift = p["beta"] - mean * scale
    h = jnp.maximum(h * scale + shift, 0.0).astype(jnp.bfloat16)
    return jnp.dot(h, p["w2"].astype(jnp.bfloat16),
                   preferred_element_type=jnp.float32) + p["b2"]


def edge_node_ref_mixed(node_rep, edge_rep, incidence, edge_params, node_params):
    inc_bf = incidence.astype(jnp.bfloat16)
    n2e = jnp.dot(inc_bf, node_rep.astype(jnp.bfloat16),
                  preferred_element_type=jnp.float32).astype(jnp.bfloat16)
    edge_out = _mlp_ref_mixed(edge_rep, n2e.astype(jnp.float32), edge_params)
    e2n = jnp.dot(inc_bf.T, edge_out.astype(jnp.bfloat16),
                  preferred_element_type=jnp.float32).astype(jnp.bfloat16)
    node_out = _mlp_ref_mixed(node_rep, e2n.astype(jnp.float32), node_params)
    return node_out, edge_out


def _mlp_ref_f32(x, p):
    hi = jax.lax.Precision.HIGHEST
    h = jnp.dot(x, p["w1"], precision=hi) + p["b1"]
    mean = h.mean(axis=0, keepdims=True)
    var = ((h - mean) ** 2).mean(axis=0, keepdims=True)
    h = (h - mean) * jax.lax.rsqrt(var + _BN_EPS) * p["gamma"] + p["beta"]
    h = jnp.maximum(h, 0.0)
    return jnp.dot(h, p["w2"], precision=hi) + p["b2"]


def edge_node_ref_f32(node_rep, edge_rep, incidence, edge_params, node_params):
    hi = jax.lax.Precision.HIGHEST
    node2edge = jnp.dot(incidence, node_rep, precision=hi)
    edge_out = _mlp_ref_f32(jnp.concatenate([edge_rep, node2edge], axis=-1), edge_params)
    edge2node = jnp.dot(incidence.T, edge_out, precision=hi)
    node_out = _mlp_ref_f32(jnp.concatenate([node_rep, edge2node], axis=-1), node_params)
    return node_out, edge_out


# --------------------------------------------------------------------------------------
# demo / self-test
# --------------------------------------------------------------------------------------
if __name__ == "__main__":
    rep_dim = 32
    n_nodes = 40
    n_edges = 40  # cycle graph: edge i connects node i and node (i+1) % n_nodes

    key = jax.random.PRNGKey(0)
    k_node, k_edge, k_mlp_e, k_mlp_n = jax.random.split(key, 4)

    node_rep = jax.random.normal(k_node, (n_nodes, rep_dim), jnp.float32)
    edge_rep = jax.random.normal(k_edge, (n_edges, rep_dim), jnp.float32)

    inc = np.zeros((n_edges, n_nodes), dtype=np.float32)
    for e in range(n_edges):
        inc[e, e] = 1.0
        inc[e, (e + 1) % n_nodes] = 1.0
    incidence = jnp.asarray(inc)

    edge_params = init_mlp_params(k_mlp_e, rep_dim)
    node_params = init_mlp_params(k_mlp_n, rep_dim)

    # mlp_row_tile=16 -> multiple row tiles (40 rows padded to 48): exercises the
    # cross-tile global-BN accumulation and the padded-row masking path.
    node_out, edge_out = edge_node_forward(node_rep, edge_rep, incidence,
                                           edge_params, node_params, mlp_row_tile=16)
    jax.block_until_ready((node_out, edge_out))

    # (a) matched-precision reference (same bf16/f32 mix as the kernels): tight-ish check
    node_mx, edge_mx = edge_node_ref_mixed(node_rep, edge_rep, incidence,
                                           edge_params, node_params)
    np.testing.assert_allclose(np.asarray(edge_out), np.asarray(edge_mx), rtol=2e-2, atol=2e-2)
    np.testing.assert_allclose(np.asarray(node_out), np.asarray(node_mx), rtol=2e-2, atol=2e-2)

    # (b) full-f32 module-spec reference: loose check (bf16 streaming / MXU matmuls are a
    #     deliberate perf choice; the 0/1 incidence matrix itself is exact in bf16).
    node_f32, edge_f32 = edge_node_ref_f32(node_rep, edge_rep, incidence,
                                           edge_params, node_params)
    np.testing.assert_allclose(np.asarray(edge_out), np.asarray(edge_f32), rtol=1e-1, atol=1e-1)
    np.testing.assert_allclose(np.asarray(node_out), np.asarray(node_f32), rtol=1e-1, atol=1e-1)

    print("KERNEL_OK")
</pallas_src>

<mosaic_0001>
module attributes {stable_mosaic.version = 11 : i64} {
  func.func @_rowtile_matmul_kernel(%arg0: i32, %arg1: memref<16x48xbf16, #tpu.memory_space<vmem>>, %arg2: memref<48x128xbf16, #tpu.memory_space<vmem>>, %arg3: memref<16x128xbf16, #tpu.memory_space<vmem>>) attributes {dimension_semantics = [#tpu.dimension_semantics<parallel>], iteration_bounds = array<i64: 3>, scalar_prefetch = 0 : i64, scratch_operands = 0 : i64, tpu.core_type = #tpu.core_type<tc>, window_params = [{transform_indices = @transform_0, window_bounds = array<i64: 16, 48>}, {pipeline_mode = #tpu.pipeline_mode<synchronous>, transform_indices = @transform_1, window_bounds = array<i64: 48, 128>}, {transform_indices = @transform_2, window_bounds = array<i64: 16, 128>}]} {
    %c0 = arith.constant 0 : index
    %c0_0 = arith.constant 0 : index
    %0 = vector.load %arg1[%c0, %c0_0] : memref<16x48xbf16, #tpu.memory_space<vmem>>, vector<16x48xbf16>
    %c0_1 = arith.constant 0 : index
    %c0_2 = arith.constant 0 : index
    %1 = vector.load %arg2[%c0_1, %c0_2] : memref<48x128xbf16, #tpu.memory_space<vmem>>, vector<48x128xbf16>
    %cst = arith.constant dense<0.000000e+00> : vector<16x128xf32>
    %2 = tpu.matmul %0, %1, %cst {dimension_numbers = #tpu.dot_dimension_numbers<[1], [0], [0], [1], [0, 0, 1, 1], [], []>} : vector<16x48xbf16>, vector<48x128xbf16>, vector<16x128xf32> -> vector<16x128xf32>
    %3 = arith.truncf %2 : vector<16x128xf32> to vector<16x128xbf16>
    %c0_3 = arith.constant 0 : index
    %c0_4 = arith.constant 0 : index
    %4 = vector.load %arg3[%c0_3, %c0_4] : memref<16x128xbf16, #tpu.memory_space<vmem>>, vector<16x128xbf16>
    tpu.vector_store %arg3[%c0_3, %c0_4], %3 {strides = array<i32>} : memref<16x128xbf16, #tpu.memory_space<vmem>>, vector<16x128xbf16>,
    return
  }
  func.func @transform_0(%arg0: i32) -> (i32, i32) {
    %c0_i32 = arith.constant 0 : i32
    %c0_i32_0 = arith.constant 0 : i32
    return %arg0, %c0_i32 : i32, i32
  }
  func.func @transform_1(%arg0: i32) -> (i32, i32) {
    %c0_i32 = arith.constant 0 : i32
    %c0_i32_0 = arith.constant 0 : i32
    %c0_i32_1 = arith.constant 0 : i32
    return %c0_i32, %c0_i32_0 : i32, i32
  }
  func.func @transform_2(%arg0: i32) -> (i32, i32) {
    %c0_i32 = arith.constant 0 : i32
    %c0_i32_0 = arith.constant 0 : i32
    return %arg0, %c0_i32 : i32, i32
  }
}

</mosaic_0001>

<llo_original>
// kernel: tpu_custom_call.1
$region0: #{tpu_custom_call.1}
  #allocation0 [shape = 'u32[]', space=smem, size = 0x4, offset = 0x4, fixed_abs, tag = 'smem constant byte address 0x4 - core index']
  #allocation1 [shape = 'u32[144,128]{1,0:T(1,128)}', space=vmem, size = 0x12000, scoped, tag = 'internal scratch']
  %s0 = inlined_call_operand.hbm [shape: bf16[48,48], index: 0, kind: input, shape index: {}]
  %s1 = inlined_call_operand.hbm [shape: bf16[48,128], index: 1, kind: input, shape index: {}]
  %s2 = inlined_call_operand.hbm [shape: bf16[48,128], index: 2, kind: output, shape index: {}]
  %s3 = sld [smem:[#allocation0]]
  $region49: #{tpu_custom_call.1} parent=0
    _
  %s5 = ssub.s32 1, %s3
  %s6 = scalar_select 0, %s5, %s3
  $region1: #{tpu_custom_call.1} parent=0
    #allocation2 [shape = 'u8[8192]{0}', space=vmem, size = 0x2000, scoped, tag = 'input window, operand 0']
    #allocation3 [shape = 's32[2]{0}', space=sflag, size = 0x8, scoped, tag = 'scoped memory for tpu_custom_call.1']
    #allocation4 [shape = 's32[2]{0}', space=sflag, size = 0x8, scoped, tag = 'scoped memory for tpu_custom_call.1']
    #allocation5 [shape = 'u8[12288]{0}', space=vmem, size = 0x3000, scoped, tag = 'input window, operand 1, single buffered']
    #allocation6 [shape = 's32[1]{0}', space=sflag, size = 0x4, scoped, tag = 'scoped memory for tpu_custom_call.1']
    #allocation7 [shape = 'u8[8192]{0}', space=vmem, size = 0x2000, scoped, tag = 'output window, operand 0']
    %7 = vsyncpa [#allocation3], 0
    %s8 = scalar_lea.sflag [#allocation3], 1
    %9 = vsyncpa %s8, 0
    %10 = vsyncpa [#allocation6], 0
    %11 = vsyncpa [#allocation4], 0
    %s12 = scalar_lea.sflag [#allocation4], 1
    %13 = vsyncpa %s12, 0
    loop: start=0, step=1, limit=5
    $region2: #{tpu_custom_call.1} parent=1 // loop_pre_header
      _
    $region3: #{tpu_custom_call.1} parent=1 // loop_header
      %s15 = sphi 0, %s19
      %p16 = scmp.ge.s32.totalorder %s15, 5
      %s25 = sphi 0, %s27
      %s28 = sphi 0, %s25
      %s29 = sphi 0, %s28
      %s45 = sphi 0, %s29
      %s49 = sphi 0, %s49
      %s51 = sphi 0, %s49
      %s52 = sphi 0, %s51
      %s66 = sphi 0, %s52
      %s72 = sphi 0, %s74
      %s75 = sphi 0, %s72
      %s76 = sphi 0, %s75
      %s92 = sphi 0, %s76
    $region4: #{tpu_custom_call.1} parent=1 // loop_header_branch
      %18 = sbr.rel (%p16) target = $region8
    $region5: #{tpu_custom_call.1} parent=1 // loop_body
      %s20 = ssub.s32 %s15, 1
      %s21 = ssub.s32 %s15, 2
      %s22 = sadd.s32 %s15, 1
      %s23 = ssub.s32 %s15, %s22
      %p24 = scmp.eq.s32.totalorder %s23, 0
      %s26 = sadd.s32 %s25, 1
      %s27 = scalar_select %p24, %s25, %s26
      %p30 = pneg %p24
      %p31 = scmp.eq.s32.totalorder %s15, 2
      %p32 = por %p30, %p31
      %p33 = scmp.ne.s32.totalorder %s25, %s28
      %p34 = scmp.eq.s32.totalorder %s15, 0
      %p35 = por %p33, %p34
      %p36 = scmp.ne.s32.totalorder %s25, %s28
      %p37 = scmp.eq.s32.totalorder %s20, 2
      %p38 = por %p36, %p37
      %p39 = scmp.ne.s32.totalorder %s28, %s29
      %p40 = scmp.eq.s32.totalorder %s20, 0
      %p41 = por %p39, %p40
      %p42 = scmp.ne.s32.totalorder %s28, %s29
      %p43 = scmp.eq.s32.totalorder %s21, 2
      %p44 = por %p42, %p43
      %p46 = scmp.ne.s32.totalorder %s29, %s45
      %p47 = scmp.eq.s32.totalorder %s21, 0
      %p48 = por %p46, %p47
      %s50 = sadd.s32 %s49, 1
      %p53 = scmp.eq.s32.totalorder %s15, 2
      %p54 = scmp.ne.s32.totalorder %s49, %s51
      %p55 = scmp.eq.s32.totalorder %s15, 0
      %p56 = por %p54, %p55
      %p57 = scmp.ne.s32.totalorder %s49, %s51
      %p58 = scmp.eq.s32.totalorder %s20, 2
      %p59 = por %p57, %p58
      %p60 = scmp.ne.s32.totalorder %s51, %s52
      %p61 = scmp.eq.s32.totalorder %s20, 0
      %p62 = por %p60, %p61
      %p63 = scmp.ne.s32.totalorder %s51, %s52
      %p64 = scmp.eq.s32.totalorder %s21, 2
      %p65 = por %p63, %p64
      %p67 = scmp.ne.s32.totalorder %s52, %s66
      %p68 = scmp.eq.s32.totalorder %s21, 0
      %p69 = por %p67, %p68
      %s70 = ssub.s32 %s15, %s22
      %p71 = scmp.eq.s32.totalorder %s70, 0
      %s73 = sadd.s32 %s72, 1
      %s74 = scalar_select %p71, %s72, %s73
      %p77 = pneg %p71
      %p78 = scmp.eq.s32.totalorder %s15, 2
      %p79 = por %p77, %p78
      %p80 = scmp.ne.s32.totalorder %s72, %s75
      %p81 = scmp.eq.s32.totalorder %s15, 0
      %p82 = por %p80, %p81
      %p83 = scmp.ne.s32.totalorder %s72, %s75
      %p84 = scmp.eq.s32.totalorder %s20, 2
      %p85 = por %p83, %p84
      %p86 = scmp.ne.s32.totalorder %s75, %s76
      %p87 = scmp.eq.s32.totalorder %s20, 0
      %p88 = por %p86, %p87
      %p89 = scmp.ne.s32.totalorder %s75, %s76
      %p90 = scmp.eq.s32.totalorder %s21, 2
      %p91 = por %p89, %p90
      %p93 = scmp.ne.s32.totalorder %s76, %s92
      %p94 = scmp.eq.s32.totalorder %s21, 0
      %p95 = por %p93, %p94
      %p96 = scmp.le.s32.totalorder 1, %s15
      %p97 = scmp.lt.s32.totalorder %s15, 4
      %p98 = pnand %p96, %p97
      %p99 = pneg %p98
      // Predicated region
      $region9: #{tpu_custom_call.1} parent=5 // pred_check
        _
      $region10: #{tpu_custom_call.1} parent=5 // pred_check_branch
        %101 = sbr.rel (%p98) target = $region12
      $region11: #{tpu_custom_call.1} parent=5 // pred_region
        %s102 = ssub.s32 %s15, 1
        // Predicated region
        $region13: #{tpu_custom_call.1} parent=11 // pred_check
          %p103 = pneg %p62
        $region14: #{tpu_custom_call.1} parent=11 // pred_check_branch
          %105 = sbr.rel (%p103) target = $region16
        $region15: #{tpu_custom_call.1} parent=11 // pred_region
          %s107 = ssub.s32 384, 384
          %108 = vsyncadd [#allocation6], %s107
          %s109 = sshll.u32 [#allocation5], 4
          %s110 = int_to_ptr.vmem [resolvable:$true] %s109
          %115 = dma.hbm_to_vmem [thread:$0]  %s1, 384, %s110, [#allocation6], 64, 64, 4
        $region16: #{tpu_custom_call.1} parent=11 // pred_fallthru
          _
      $region12: #{tpu_custom_call.1} parent=5 // pred_fallthru
        _
      %p116 = scmp.lt.s32.totalorder %s15, 3
      // Predicated region
      $region17: #{tpu_custom_call.1} parent=5 // pred_check
        %p117 = pneg %p116
      $region18: #{tpu_custom_call.1} parent=5 // pred_check_branch
        %119 = sbr.rel (%p117) target = $region20
      $region19: #{tpu_custom_call.1} parent=5 // pred_region
        // Predicated region
        $region21: #{tpu_custom_call.1} parent=19 // pred_check
          %p120 = pneg %p35
        $region22: #{tpu_custom_call.1} parent=19 // pred_check_branch
          %122 = sbr.rel (%p120) target = $region24
        $region23: #{tpu_custom_call.1} parent=19 // pred_region
          %s123 = sand.u32 %s25, 1
          %s124 = scalar_lea.sflag [#allocation3], %s123
          %s125 = sand.u32 %s25, 1
          %s126 = smul.addr %s125, 8
          %s127 = scalar_lea.vmem [#allocation2], %s126
          %s128 = smul.u32 2, %s15
          %s130 = ssub.s32 128, 128
          %131 = vsyncadd %s124, %s130
          %s132 = smul.addr %s128, 64
          %s133 = scalar_lea.hbm %s0, %s132
          %s134 = sshll.u32 %s127, 4
          %s135 = int_to_ptr.vmem [resolvable:$true] %s134
          %140 = dma.hbm_to_vmem [thread:$0]  %s133, 128, %s135, %s124, 64, 64, 4
        $region24: #{tpu_custom_call.1} parent=19 // pred_fallthru
          _
      $region20: #{tpu_custom_call.1} parent=5 // pred_fallthru
        _
      %p141 = scmp.le.s32.totalorder 1, %s15
      %p142 = scmp.lt.s32.totalorder %s15, 4
      %p143 = pnand %p141, %p142
      %p144 = pneg %p143
      // Predicated region
      $region25: #{tpu_custom_call.1} parent=5 // pred_check
        _
      $region26: #{tpu_custom_call.1} parent=5 // pred_check_branch
        %146 = sbr.rel (%p143) target = $region28
      $region27: #{tpu_custom_call.1} parent=5 // pred_region
        %s147 = ssub.s32 %s15, 1
        %s148 = sand.u32 %s28, 1
        %s149 = scalar_lea.sflag [#allocation3], %s148
        %s150 = sand.u32 %s28, 1
        %s151 = smul.addr %s150, 8
        %s152 = scalar_lea.vmem [#allocation2], %s151
        // Predicated region
        $region29: #{tpu_custom_call.1} parent=27 // pred_check
          %p153 = pneg %p41
        $region30: #{tpu_custom_call.1} parent=27 // pred_check_branch
          %155 = sbr.rel (%p153) target = $region32
        $region31: #{tpu_custom_call.1} parent=27 // pred_region
          %156 = dma.done %s149, 128
        $region32: #{tpu_custom_call.1} parent=27 // pred_fallthru
          _
        // Predicated region
        $region33: #{tpu_custom_call.1} parent=27 // pred_check
          %p157 = pneg %p62
        $region34: #{tpu_custom_call.1} parent=27 // pred_check_branch
          %159 = sbr.rel (%p157) target = $region36
        $region35: #{tpu_custom_call.1} parent=27 // pred_region
          %160 = dma.done [#allocation6], 384
        $region36: #{tpu_custom_call.1} parent=27 // pred_fallthru
          _
        %s161 = sand.u32 %s28, 1
        %s162 = scalar_lea.sflag [#allocation3], %s161
        %s163 = sand.u32 %s28, 1
        %s164 = smul.addr %s163, 8
        %s165 = scalar_lea.vmem [#allocation2], %s164
        %p166 = pneg %p41
        %p167 = pneg %p38
        %p168 = pneg %p62
        %p169 = pneg %p59
        %p170 = pneg %p88
        %p171 = pneg %p85
        %s172 = sand.u32 %s75, 1
        %s173 = scalar_lea.sflag [#allocation4], %s172
        %s174 = sand.u32 %s75, 1
        %s175 = smul.addr %s174, 8
        %s176 = scalar_lea.vmem [#allocation7], %s175
        %s177 = smul.u32 2, %s20
        %s178 = smul.u32 2, %s20
        %v180 = vld [vmem:[%s152] sm:$0xf]
        %v181 = vld [vmem:[%s152 + $0x4] sm:$0xf]
        %v182 = vld [vmem:[#allocation5] sm:$0xf]
        %v183 = vld [vmem:[#allocation5 + $0x4] sm:$0xf]
        %v184 = vld [vmem:[#allocation5 + $0x8] sm:$0xf]
        %v185 = vld [vmem:[#allocation5 + $0xc] sm:$0xf]
        %v186 = vld [vmem:[#allocation5 + $0x10] sm:$0xf]
        %v187 = vld [vmem:[#allocation5 + $0x14] sm:$0xf]
        %v190 = vunpack.c.l.b16 %v180
        %v191 = vunpack.c.l.b16 %v181
        %v192 = vpack.c.b16 %v191, %v190
        %v199 = vunpack.c.l.b16 %v182
        %v200 = vunpack.c.l.b16 %v183
        %v201 = vunpack.c.l.b16 %v184
        %v202 = vunpack.c.l.b16 %v185
        %v203 = vunpack.c.l.b16 %v186
        %v204 = vunpack.c.l.b16 %v187
        %v205 = vpack.c.b16 %v200, %v199
        %v206 = vpack.c.b16 %v202, %v201
        %v207 = vpack.c.b16 %v204, %v203
        %vm211 = vcmask 392192
        %v213 = vsel %vm211, %v192, 0
        %215 = vmatprep.subr.bf16.mxu0 0
        %216 = vmatpush1.bf16.msra.mxu0 0
        %217 = vmatprep.subr.bf16.mxu0 0
        %218 = vmatpush1.bf16.msra.mxu0 0
        %219 = vmatprep.subr.bf16.mxu0 0
        %220 = vmatpush1.bf16.msra.mxu0 0
        %221 = vmatprep.subr.bf16.mxu0 0
        %222 = vmatpush1.bf16.msra.mxu0 0
        %223 = vmatprep.subr.bf16.mxu0 0
        %224 = vmatpush1.bf16.msra.mxu0 0
        %225 = vmatprep.subr.bf16.mxu0 0
        %226 = vmatpush1.bf16.msra.mxu0 %v207
        %227 = vmatprep.subr.bf16.mxu0 0
        %228 = vmatpush1.bf16.msra.mxu0 %v206
        %229 = vmatprep.subr.bf16.mxu0 0
        %230 = vmatpush1.bf16.msra.mxu0 %v205
        %231 = vmatprep.subr.bf16.mxu0 0
        %232 = vmatpush2.bf16.msra.mxu0 0
        %233 = vmatprep.subr.bf16.mxu0 0
        %234 = vmatpush2.bf16.msra.mxu0 0
        %235 = vmatprep.subr.bf16.mxu0 0
        %236 = vmatpush2.bf16.msra.mxu0 0
        %237 = vmatprep.subr.bf16.mxu0 0
        %238 = vmatpush2.bf16.msra.mxu0 0
        %239 = vmatprep.subr.bf16.mxu0 0
        %240 = vmatpush2.bf16.msra.mxu0 0
        %241 = vmatprep.subr.bf16.mxu0 0
        %242 = vmatpush2.bf16.msra.mxu0 0
        %243 = vmatprep.subr.bf16.mxu0 0
        %244 = vmatpush2.bf16.msra.mxu0 0
        %245 = vmatprep.subr.bf16.mxu0 0
        %246 = vmatpush2.bf16.msra.mxu0 0
        %247 = vmatprep.mubr.bf16.mxu0 0
        %248 = vmatmul.mubr.bf16.gmra.mxu0 %v213
        %v249 = vpop.f32.mrf.mxu0
        %v250 = vadd.f32 0.0, %v249
        %v251 = vpop.f32.mrf.mxu0
        %v252 = vpop.f32.mrf.mxu0
        %v253 = vadd.f32 0.0, %v252
        %v254 = vpop.f32.mrf.mxu0
        %255 = vdwg.mxu0
        %v256 = vpack.c.bf16 %v253, %v250
        %v258 = vunpack.c.l.b16 %v256
        %v259 = vunpack.c.h.b16 %v256
        %v260 = vpack.c.b16 %v258, %v258
        %v261 = vpack.c.b16 %v259, %v259
        %264 = vst [vmem:[%s176] sm:$0xf] %v260
        %265 = vst [vmem:[%s176 + $0x4] sm:$0xf] %v261
        %s266 = sand.u32 %s75, 1
        %s267 = scalar_lea.sflag [#allocation4], %s266
        %s268 = sand.u32 %s75, 1
        %s269 = smul.addr %s268, 8
        %s270 = scalar_lea.vmem [#allocation7], %s269
        // Predicated region
        $region37: #{tpu_custom_call.1} parent=27 // pred_check
          %p271 = pneg %p85
        $region38: #{tpu_custom_call.1} parent=27 // pred_check_branch
          %273 = sbr.rel (%p271) target = $region40
        $region39: #{tpu_custom_call.1} parent=27 // pred_region
          %s274 = smul.u32 2, %s20
          %s276 = ssub.s32 128, 128
          %277 = vsyncadd %s267, %s276
          %s278 = smul.addr %s274, 64
          %s279 = scalar_lea.hbm %s2, %s278
          %s280 = sshll.u32 %s270, 4
          %s281 = int_to_ptr.vmem [resolvable:$true] %s280
          %286 = dma.vmem_to_hbm [thread:$0]  %s281, 128, %s279, %s267, 64, 64, 4
        $region40: #{tpu_custom_call.1} parent=27 // pred_fallthru
          _
      $region28: #{tpu_custom_call.1} parent=5 // pred_fallthru
        _
      %p287 = scmp.le.s32.totalorder 2, %s15
      // Predicated region
      $region41: #{tpu_custom_call.1} parent=5 // pred_check
        %p288 = pneg %p287
      $region42: #{tpu_custom_call.1} parent=5 // pred_check_branch
        %290 = sbr.rel (%p288) target = $region44
      $region43: #{tpu_custom_call.1} parent=5 // pred_region
        %s291 = ssub.s32 %s15, 2
        // Predicated region
        $region45: #{tpu_custom_call.1} parent=43 // pred_check
          %p292 = pneg %p91
        $region46: #{tpu_custom_call.1} parent=43 // pred_check_branch
          %294 = sbr.rel (%p292) target = $region48
        $region47: #{tpu_custom_call.1} parent=43 // pred_region
          %s295 = sand.u32 %s76, 1
          %s296 = scalar_lea.sflag [#allocation4], %s295
          %s297 = sand.u32 %s76, 1
          %s298 = smul.addr %s297, 8
          %s299 = scalar_lea.vmem [#allocation7], %s298
          %300 = dma.done %s296, 128
        $region48: #{tpu_custom_call.1} parent=43 // pred_fallthru
          _
      $region44: #{tpu_custom_call.1} parent=5 // pred_fallthru
        _
    $region6: #{tpu_custom_call.1} parent=1 // loop_footer
      %s19 = sadd.s32 1, %s15
    $region7: #{tpu_custom_call.1} parent=1 // loop_footer_branch
      %14 = sbr.rel target = $region3
    $region8: #{tpu_custom_call.1} parent=1 // loop_exit
      _
    %301 = vsyncpa [#allocation3], 1
    %s302 = scalar_lea.sflag [#allocation3], 1
    %303 = vsyncpa %s302, 1
    %304 = vsyncpa [#allocation6], 1
    %305 = vsyncpa [#allocation4], 1
    %s306 = scalar_lea.sflag [#allocation4], 1
    %307 = vsyncpa %s306, 1

</llo_original>
